<compile_context>
chip_gen: v5e
topology: v5e:2x2
jax: 0.10.0
libtpu: 0.0.40
codegen_flags: <defaults>
</compile_context>

<pallas_src>
import functools

import jax
import jax.numpy as jnp
from jax.experimental import pallas as pl
from jax.experimental.pallas import tpu as pltpu


def _dice_sums_kernel(pred_ref, label_ref, anb_ref, aub_ref, *,
                      square, rows_total, h_tile, steps_per_chunk, needs_mask):
    """One (batch element, parallel chunk, row tile) step.

    pred_ref : (1, C, h_tile, L)  probability map (f32 or bf16)
    label_ref: (1, h_tile, L)     integer class ids (native dtype)
    anb_ref  : (1, 1, 1) f32      running sum(pred * onehot(label))   [out]
    aub_ref  : (1, 1, 1) f32      running sum(pred) (or sum(pred**2)) [out]
    """
    s = pl.program_id(2)

    label = label_ref[0]                       # (h_tile, L), native int dtype
    C = pred_ref.shape[1]

    # Peel c == 0 (initializes the accumulators without zeros+add); upcast one
    # channel slice at a time so only one f32 channel temporary is live.
    pc = pred_ref[0, 0].astype(jnp.float32)
    anb_pix = jnp.where(label == 0, pc, 0.0)
    aub_pix = pc * pc if square else pc
    for c in range(1, C):
        pc = pred_ref[0, c].astype(jnp.float32)
        anb_pix = anb_pix + jnp.where(label == c, pc, 0.0)
        aub_pix = aub_pix + (pc * pc if square else pc)

    if needs_mask:
        # Row-tile does not divide the row count: zero out-of-range rows of the
        # (only partially valid) last tile before folding.
        row_start = (pl.program_id(1) * steps_per_chunk + s) * h_tile
        row_ids = jax.lax.broadcasted_iota(jnp.int32, anb_pix.shape, 0)
        valid = row_ids < (rows_total - row_start)
        anb_pix = jnp.where(valid, anb_pix, 0.0)
        aub_pix = jnp.where(valid, aub_pix, 0.0)

    @pl.when(s == 0)
    def _():
        anb_ref[...] = jnp.zeros_like(anb_ref)
        aub_ref[...] = jnp.zeros_like(aub_ref)

    # Per-step fold to scalars (rides the otherwise-idle XLU slot) accumulated
    # straight into the VMEM-resident output block.
    anb_ref[...] += jnp.sum(anb_pix, keepdims=True)[None]
    aub_ref[...] += jnp.sum(aub_pix, keepdims=True)[None]


def _lane_dense_factor(spatial_size, last_dim):
    """Factor the flattened spatial size into (rows, lanes), lanes % 128 == 0
    when possible (prefer rows % 8 == 0 too).  Any consistent flattening is
    valid because the math is purely elementwise over spatial positions."""
    if last_dim % 128 == 0:
        return spatial_size // last_dim, last_dim
    fallback = None
    for lanes in range(1024, 127, -128):
        if spatial_size % lanes == 0:
            rows = spatial_size // lanes
            if rows % 8 == 0 or rows == 1:
                return rows, lanes
            if fallback is None:
                fallback = (rows, lanes)
    if fallback is not None:
        return fallback
    return spatial_size // last_dim, last_dim


def _pick_h_tile(rows, bytes_per_row, budget_bytes):
    """Largest row tile whose true (double-buffered) footprint fits the budget.

    Prefers a divisor of `rows` (multiple of 8); otherwise falls back to a
    non-divisor tile with a cdiv grid + in-kernel row masking so the block
    never exceeds the budget."""
    if rows * bytes_per_row <= budget_bytes:
        return rows, False
    max_rows = max(8, (budget_bytes // max(bytes_per_row, 1)) // 8 * 8)
    max_rows = min(max_rows, rows)
    h = max_rows
    tries = 0
    while h >= 8 and tries < 4096:
        if rows % h == 0:
            return h, False
        h -= 8
        tries += 1
    return max_rows, True


def dice_loss_pallas(pred, label, *, square=False):
    """Dice loss with the module defaults (batch_dice=True, weight=1):

        loss = 1 - 2 * sum(pred * onehot(label)) / sum(pred + onehot(label))

    pred : (N, C, H, W) or (N, C, D, H, W) probability map.
    label: (N, H, W)    or (N, D, H, W)    integer class ids in [0, C).
    """
    # TODO(synk): batch_dice=False per-instance reduction and non-scalar weight
    # maps are not wired into the kernel; the module defaults (batch_dice=True,
    # scalar weight=1, `smooth` unused by the reference) are reproduced here.
    assert pred.ndim in (4, 5)
    N, C = pred.shape[0], pred.shape[1]
    spatial = pred.shape[2:]
    assert label.shape == (N,) + spatial

    spatial_size = 1
    for d in spatial:
        spatial_size *= d

    R, L = _lane_dense_factor(spatial_size, spatial[-1])
    pred = pred.reshape(N, C, R, L)
    label = label.reshape(N, R, L)           # read in its native integer dtype

    pred_item = jnp.dtype(pred.dtype).itemsize
    label_item = jnp.dtype(label.dtype).itemsize
    # Real per-row VMEM footprint: double-buffered pred + label blocks plus
    # ~4 f32 temp planes (per-channel upcast, anb/aub partials, select temp).
    bytes_per_row = L * (2 * C * pred_item + 2 * label_item + 4 * 4)
    budget = 40 << 20                        # total stays < ~48 MiB (v7x-safe)
    h_tile, needs_mask = _pick_h_tile(R, bytes_per_row, budget)

    steps = pl.cdiv(R, h_tile) if needs_mask else R // h_tile
    # Guarantee >= 2 independent "parallel" grid units for v7x's 2 TensorCores.
    P = 2 if (N == 1 and steps >= 2 and steps % 2 == 0) else 1
    steps_per_chunk = steps // P
    G = N * P

    vmem_limit = int(min(max(h_tile * bytes_per_row + (1 << 20), 32 << 20),
                         56 << 20))

    kernel = functools.partial(
        _dice_sums_kernel, square=square, rows_total=R, h_tile=h_tile,
        steps_per_chunk=steps_per_chunk, needs_mask=needs_mask)

    anb, aub_pred = pl.pallas_call(
        kernel,
        out_shape=(
            jax.ShapeDtypeStruct((G, 1, 1), jnp.float32),
            jax.ShapeDtypeStruct((G, 1, 1), jnp.float32),
        ),
        grid_spec=pltpu.PrefetchScalarGridSpec(
            num_scalar_prefetch=0,
            grid=(N, P, steps_per_chunk),
            in_specs=[
                pl.BlockSpec((1, C, h_tile, L),
                             lambda n, p, s: (n, 0, p * steps_per_chunk + s, 0)),
                pl.BlockSpec((1, h_tile, L),
                             lambda n, p, s: (n, p * steps_per_chunk + s, 0)),
            ],
            out_specs=(
                pl.BlockSpec((1, 1, 1), lambda n, p, s: (n * P + p, 0, 0)),
                pl.BlockSpec((1, 1, 1), lambda n, p, s: (n * P + p, 0, 0)),
            ),
        ),
        compiler_params=pltpu.CompilerParams(
            dimension_semantics=("parallel", "parallel", "arbitrary"),
            vmem_limit_bytes=vmem_limit),
    )(pred, label)

    anb_sum = jnp.sum(anb)
    # onehot**2 == onehot and each pixel's one-hot row sums to 1, so for both
    # `square` settings: sum(onehot[**2]) == number of pixels.
    aub_sum = jnp.sum(aub_pred) + jnp.float32(label.size)
    return 1.0 - 2.0 * anb_sum / aub_sum


if __name__ == "__main__":
    key = jax.random.PRNGKey(0)
    k1, k2 = jax.random.split(key)

    N, C, H, W = 2, 4, 16, 16
    logits = jax.random.normal(k1, (N, C, H, W), dtype=jnp.float32)
    pred = jax.nn.softmax(logits, axis=1)                       # probability map
    label = jax.random.randint(k2, (N, H, W), 0, C, dtype=jnp.int32)

    loss = jax.block_until_ready(dice_loss_pallas(pred, label))

    # pure-JAX reference (mirrors the PyTorch code with the module defaults)
    onehot = jax.nn.one_hot(label, C, axis=1, dtype=jnp.float32)  # (N,C,H,W)
    anb_ref = jnp.sum(pred * onehot)
    aub_ref = jnp.sum(pred + onehot)
    loss_ref = 1.0 - 2.0 * anb_ref / aub_ref

    assert jnp.allclose(loss, loss_ref, rtol=1e-5, atol=1e-5), (loss, loss_ref)
    print("KERNEL_OK")
</pallas_src>

<mosaic_0001>
module attributes {stable_mosaic.version = 11 : i64} {
  func.func @_dice_sums_kernel(%arg0: i32, %arg1: i32, %arg2: i32, %arg3: memref<1x4x1x256xf32, #tpu.memory_space<vmem>>, %arg4: memref<1x1x256xi32, #tpu.memory_space<vmem>>, %arg5: memref<1x1x1xf32, #tpu.memory_space<vmem>>, %arg6: memref<1x1x1xf32, #tpu.memory_space<vmem>>) attributes {dimension_semantics = [#tpu.dimension_semantics<parallel>, #tpu.dimension_semantics<parallel>, #tpu.dimension_semantics<arbitrary>], iteration_bounds = array<i64: 2, 1, 1>, scalar_prefetch = 0 : i64, scratch_operands = 0 : i64, tpu.core_type = #tpu.core_type<tc>, window_params = [{transform_indices = @transform_0, window_bounds = array<i64: 1, 4, 1, 256>}, {transform_indices = @transform_1, window_bounds = array<i64: 1, 1, 256>}, {transform_indices = @transform_2, window_bounds = array<i64: 1, 1, 1>}, {transform_indices = @transform_3, window_bounds = array<i64: 1, 1, 1>}]} {
    %c0 = arith.constant 0 : index
    %c0_0 = arith.constant 0 : index
    %c0_1 = arith.constant 0 : index
    %0 = vector.load %arg4[%c0, %c0_0, %c0_1] : memref<1x1x256xi32, #tpu.memory_space<vmem>>, vector<1x1x256xi32>
    %1 = vector.shape_cast %0 : vector<1x1x256xi32> to vector<1x256xi32>
    %c0_2 = arith.constant 0 : index
    %c0_3 = arith.constant 0 : index
    %c0_4 = arith.constant 0 : index
    %c0_5 = arith.constant 0 : index
    %2 = vector.load %arg3[%c0_2, %c0_3, %c0_4, %c0_5] : memref<1x4x1x256xf32, #tpu.memory_space<vmem>>, vector<1x1x1x256xf32>
    %3 = vector.shape_cast %2 : vector<1x1x1x256xf32> to vector<1x256xf32>
    %c0_i32 = arith.constant 0 : i32
    %4 = vector.broadcast %c0_i32 : i32 to vector<1x256xi32>
    %5 = arith.cmpi eq, %1, %4 : vector<1x256xi32>
    %cst = arith.constant 0.000000e+00 : f32
    %6 = vector.broadcast %cst : f32 to vector<1x256xf32>
    %7 = arith.select %5, %3, %6 : vector<1x256xi1>, vector<1x256xf32>
    %c0_6 = arith.constant 0 : index
    %c1 = arith.constant 1 : index
    %c0_7 = arith.constant 0 : index
    %c0_8 = arith.constant 0 : index
    %8 = vector.load %arg3[%c0_6, %c1, %c0_7, %c0_8] : memref<1x4x1x256xf32, #tpu.memory_space<vmem>>, vector<1x1x1x256xf32>
    %9 = vector.shape_cast %8 : vector<1x1x1x256xf32> to vector<1x256xf32>
    %c1_i32 = arith.constant 1 : i32
    %10 = vector.broadcast %c1_i32 : i32 to vector<1x256xi32>
    %11 = arith.cmpi eq, %1, %10 : vector<1x256xi32>
    %cst_9 = arith.constant 0.000000e+00 : f32
    %12 = vector.broadcast %cst_9 : f32 to vector<1x256xf32>
    %13 = arith.select %11, %9, %12 : vector<1x256xi1>, vector<1x256xf32>
    %14 = arith.addf %7, %13 : vector<1x256xf32>
    %15 = arith.addf %3, %9 : vector<1x256xf32>
    %c0_10 = arith.constant 0 : index
    %c2 = arith.constant 2 : index
    %c0_11 = arith.constant 0 : index
    %c0_12 = arith.constant 0 : index
    %16 = vector.load %arg3[%c0_10, %c2, %c0_11, %c0_12] : memref<1x4x1x256xf32, #tpu.memory_space<vmem>>, vector<1x1x1x256xf32>
    %17 = vector.shape_cast %16 : vector<1x1x1x256xf32> to vector<1x256xf32>
    %c2_i32 = arith.constant 2 : i32
    %18 = vector.broadcast %c2_i32 : i32 to vector<1x256xi32>
    %19 = arith.cmpi eq, %1, %18 : vector<1x256xi32>
    %cst_13 = arith.constant 0.000000e+00 : f32
    %20 = vector.broadcast %cst_13 : f32 to vector<1x256xf32>
    %21 = arith.select %19, %17, %20 : vector<1x256xi1>, vector<1x256xf32>
    %22 = arith.addf %14, %21 : vector<1x256xf32>
    %23 = arith.addf %15, %17 : vector<1x256xf32>
    %c0_14 = arith.constant 0 : index
    %c3 = arith.constant 3 : index
    %c0_15 = arith.constant 0 : index
    %c0_16 = arith.constant 0 : index
    %24 = vector.load %arg3[%c0_14, %c3, %c0_15, %c0_16] : memref<1x4x1x256xf32, #tpu.memory_space<vmem>>, vector<1x1x1x256xf32>
    %25 = vector.shape_cast %24 : vector<1x1x1x256xf32> to vector<1x256xf32>
    %c3_i32 = arith.constant 3 : i32
    %26 = vector.broadcast %c3_i32 : i32 to vector<1x256xi32>
    %27 = arith.cmpi eq, %1, %26 : vector<1x256xi32>
    %cst_17 = arith.constant 0.000000e+00 : f32
    %28 = vector.broadcast %cst_17 : f32 to vector<1x256xf32>
    %29 = arith.select %27, %25, %28 : vector<1x256xi1>, vector<1x256xf32>
    %30 = arith.addf %22, %29 : vector<1x256xf32>
    %31 = arith.addf %23, %25 : vector<1x256xf32>
    %c0_i32_18 = arith.constant 0 : i32
    %32 = arith.cmpi eq, %arg2, %c0_i32_18 : i32
    %33 = arith.extui %32 : i1 to i32
    %c0_i32_19 = arith.constant 0 : i32
    %34 = arith.cmpi ne, %33, %c0_i32_19 : i32
    scf.if %34 {
      %cst_34 = arith.constant 0.000000e+00 : f32
      %53 = vector.broadcast %cst_34 : f32 to vector<1x1x1xf32>
      %c0_35 = arith.constant 0 : index
      %c0_36 = arith.constant 0 : index
      %c0_37 = arith.constant 0 : index
      %54 = vector.load %arg5[%c0_35, %c0_36, %c0_37] : memref<1x1x1xf32, #tpu.memory_space<vmem>>, vector<1x1x1xf32>
      tpu.vector_store %arg5[%c0_35, %c0_36, %c0_37], %53 {strides = array<i32>} : memref<1x1x1xf32, #tpu.memory_space<vmem>>, vector<1x1x1xf32>,
      %cst_38 = arith.constant 0.000000e+00 : f32
      %55 = vector.broadcast %cst_38 : f32 to vector<1x1x1xf32>
      %c0_39 = arith.constant 0 : index
      %c0_40 = arith.constant 0 : index
      %c0_41 = arith.constant 0 : index
      %56 = vector.load %arg6[%c0_39, %c0_40, %c0_41] : memref<1x1x1xf32, #tpu.memory_space<vmem>>, vector<1x1x1xf32>
      tpu.vector_store %arg6[%c0_39, %c0_40, %c0_41], %55 {strides = array<i32>} : memref<1x1x1xf32, #tpu.memory_space<vmem>>, vector<1x1x1xf32>,
    } else {
    }
    %c0_20 = arith.constant 0 : index
    %c0_21 = arith.constant 0 : index
    %c0_22 = arith.constant 0 : index
    %35 = vector.load %arg5[%c0_20, %c0_21, %c0_22] : memref<1x1x1xf32, #tpu.memory_space<vmem>>, vector<1x1x1xf32>
    %36 = vector.shape_cast %30 : vector<1x256xf32> to vector<1x1x256xf32>
    %cst_23 = arith.constant dense<0.000000e+00> : vector<1xf32>
    %37 = vector.multi_reduction <add>, %36, %cst_23 [1, 2] : vector<1x1x256xf32> to vector<1xf32>
    %38 = vector.shape_cast %37 : vector<1xf32> to vector<1x1x1xf32>
    %39 = vector.extract %38[0, 0, 0] : f32 from vector<1x1x1xf32>
    %40 = vector.broadcast %39 : f32 to vector<1x1xf32>
    %41 = vector.shape_cast %40 : vector<1x1xf32> to vector<1x1x1xf32>
    %42 = arith.addf %35, %41 : vector<1x1x1xf32>
    %c0_24 = arith.constant 0 : index
    %c0_25 = arith.constant 0 : index
    %c0_26 = arith.constant 0 : index
    %43 = vector.load %arg5[%c0_24, %c0_25, %c0_26] : memref<1x1x1xf32, #tpu.memory_space<vmem>>, vector<1x1x1xf32>
    tpu.vector_store %arg5[%c0_24, %c0_25, %c0_26], %42 {strides = array<i32>} : memref<1x1x1xf32, #tpu.memory_space<vmem>>, vector<1x1x1xf32>,
    %c0_27 = arith.constant 0 : index
    %c0_28 = arith.constant 0 : index
    %c0_29 = arith.constant 0 : index
    %44 = vector.load %arg6[%c0_27, %c0_28, %c0_29] : memref<1x1x1xf32, #tpu.memory_space<vmem>>, vector<1x1x1xf32>
    %45 = vector.shape_cast %31 : vector<1x256xf32> to vector<1x1x256xf32>
    %cst_30 = arith.constant dense<0.000000e+00> : vector<1xf32>
    %46 = vector.multi_reduction <add>, %45, %cst_30 [1, 2] : vector<1x1x256xf32> to vector<1xf32>
    %47 = vector.shape_cast %46 : vector<1xf32> to vector<1x1x1xf32>
    %48 = vector.extract %47[0, 0, 0] : f32 from vector<1x1x1xf32>
    %49 = vector.broadcast %48 : f32 to vector<1x1xf32>
    %50 = vector.shape_cast %49 : vector<1x1xf32> to vector<1x1x1xf32>
    %51 = arith.addf %44, %50 : vector<1x1x1xf32>
    %c0_31 = arith.constant 0 : index
    %c0_32 = arith.constant 0 : index
    %c0_33 = arith.constant 0 : index
    %52 = vector.load %arg6[%c0_31, %c0_32, %c0_33] : memref<1x1x1xf32, #tpu.memory_space<vmem>>, vector<1x1x1xf32>
    tpu.vector_store %arg6[%c0_31, %c0_32, %c0_33], %51 {strides = array<i32>} : memref<1x1x1xf32, #tpu.memory_space<vmem>>, vector<1x1x1xf32>,
    return
  }
  func.func @transform_0(%arg0: i32, %arg1: i32, %arg2: i32) -> (i32, i32, i32, i32) {
    %c1_i32 = arith.constant 1 : i32
    %0 = arith.muli %arg1, %c1_i32 : i32
    %1 = arith.addi %0, %arg2 : i32
    %c0_i32 = arith.constant 0 : i32
    %c0_i32_0 = arith.constant 0 : i32
    %c0_i32_1 = arith.constant 0 : i32
    return %arg0, %c0_i32, %1, %c0_i32_0 : i32, i32, i32, i32
  }
  func.func @transform_1(%arg0: i32, %arg1: i32, %arg2: i32) -> (i32, i32, i32) {
    %c1_i32 = arith.constant 1 : i32
    %0 = arith.muli %arg1, %c1_i32 : i32
    %1 = arith.addi %0, %arg2 : i32
    %c0_i32 = arith.constant 0 : i32
    %c0_i32_0 = arith.constant 0 : i32
    return %arg0, %1, %c0_i32 : i32, i32, i32
  }
  func.func @transform_2(%arg0: i32, %arg1: i32, %arg2: i32) -> (i32, i32, i32) {
    %c1_i32 = arith.constant 1 : i32
    %0 = arith.muli %arg0, %c1_i32 : i32
    %1 = arith.addi %0, %arg1 : i32
    %c0_i32 = arith.constant 0 : i32
    %c0_i32_0 = arith.constant 0 : i32
    %c0_i32_1 = arith.constant 0 : i32
    return %1, %c0_i32, %c0_i32_0 : i32, i32, i32
  }
  func.func @transform_3(%arg0: i32, %arg1: i32, %arg2: i32) -> (i32, i32, i32) {
    %c1_i32 = arith.constant 1 : i32
    %0 = arith.muli %arg0, %c1_i32 : i32
    %1 = arith.addi %0, %arg1 : i32
    %c0_i32 = arith.constant 0 : i32
    %c0_i32_0 = arith.constant 0 : i32
    %c0_i32_1 = arith.constant 0 : i32
    return %1, %c0_i32, %c0_i32_0 : i32, i32, i32
  }
}

</mosaic_0001>

<llo_original>
// kernel: tpu_custom_call.1
$region0: #{tpu_custom_call.1}
  #allocation0 [shape = 'u32[]', space=smem, size = 0x4, offset = 0x4, fixed_abs, tag = 'smem constant byte address 0x4 - core index']
  #allocation1 [shape = 'u32[72,128]{1,0:T(1,128)}', space=vmem, size = 0x9000, scoped, tag = 'internal scratch']
  %s0 = inlined_call_operand.hbm [shape: f32[2,4,1,256], index: 0, kind: input, shape index: {}]
  %s1 = inlined_call_operand.hbm [shape: s32[2,1,256], index: 1, kind: input, shape index: {}]
  %s2 = inlined_call_operand.vmem [shape: f32[2,1,1], index: 2, kind: output, shape index: {0}]
  %s3 = inlined_call_operand.vmem [shape: f32[2,1,1], index: 3, kind: output, shape index: {1}]
  %4 = xla_tuple %s2, %s3
  %s5 = sld [smem:[#allocation0]]
  $region61: #{tpu_custom_call.1} parent=0
    _
  %s7 = ssub.s32 1, %s5
  %s8 = scalar_select 0, %s7, %s5
  $region1: #{tpu_custom_call.1} parent=0
    #allocation2 [shape = 'u8[8192]{0}', space=vmem, size = 0x2000, scoped, tag = 'input window, operand 0']
    #allocation3 [shape = 's32[2]{0}', space=sflag, size = 0x8, scoped, tag = 'scoped memory for tpu_custom_call.1']
    #allocation4 [shape = 'u8[2048]{0}', space=vmem, size = 0x800, scoped, tag = 'input window, operand 1']
    #allocation5 [shape = 's32[2]{0}', space=sflag, size = 0x8, scoped, tag = 'scoped memory for tpu_custom_call.1']
    %9 = vsyncpa [#allocation3], 0
    %s10 = scalar_lea.sflag [#allocation3], 1
    %11 = vsyncpa %s10, 0
    %12 = vsyncpa [#allocation5], 0
    %s13 = scalar_lea.sflag [#allocation5], 1
    %14 = vsyncpa %s13, 0
    loop: start=0, step=1, limit=4
    $region2: #{tpu_custom_call.1} parent=1 // loop_pre_header
      _
    $region3: #{tpu_custom_call.1} parent=1 // loop_header
      %s16 = sphi 0, %s20
      %p17 = scmp.ge.s32.totalorder %s16, 4
      %s23 = sphi 0, %s42
      %s24 = sphi 0, %s38
      %s25 = sphi 0, %s34
      %s26 = sphi 0, %s23
      %s27 = sphi 0, %s24
      %s28 = sphi 0, %s25
      %s29 = sphi 0, %s26
      %s30 = sphi 0, %s27
      %s31 = sphi 0, %s28
      %s49 = sphi 0, %s51
      %s52 = sphi 0, %s49
      %s53 = sphi 0, %s52
      %s69 = sphi 0, %s53
      %s79 = sphi 0, %s81
      %s82 = sphi 0, %s79
      %s83 = sphi 0, %s82
      %s99 = sphi 0, %s83
      %s107 = sphi 0, %s109
      %s110 = sphi 0, %s107
      %s111 = sphi 0, %s110
      %s127 = sphi 0, %s111
      %s135 = sphi 0, %s137
      %s138 = sphi 0, %s135
      %s139 = sphi 0, %s138
      %s155 = sphi 0, %s139
    $region4: #{tpu_custom_call.1} parent=1 // loop_header_branch
      %19 = sbr.rel (%p17) target = $region8
    $region5: #{tpu_custom_call.1} parent=1 // loop_body
      %s21 = ssub.s32 %s16, 1
      %s22 = ssub.s32 %s16, 2
      %s32 = sadd.s32 1, %s25
      %p33 = scmp.ge.s32.totalorder %s32, 1
      %s34 = scalar_select %p33, 0, %s32
      %s35 = sadd.s32 1, %s24
      %s36 = scalar_select %p33, %s35, %s24
      %p37 = scmp.ge.s32.totalorder %s36, 1
      %s38 = scalar_select %p37, 0, %s36
      %s39 = sadd.s32 1, %s23
      %s40 = scalar_select %p37, %s39, %s23
      %p41 = scmp.ge.s32.totalorder %s40, 2
      %s42 = scalar_select %p41, 0, %s40
      %s43 = sadd.s32 %s24, %s25
      %s44 = sadd.s32 %s38, %s34
      %s45 = ssub.s32 %s23, %s42
      %s46 = ssub.s32 %s43, %s44
      %s47 = sor.u32 %s45, %s46
      %p48 = scmp.eq.s32.totalorder %s47, 0
      %s50 = sadd.s32 %s49, 1
      %s51 = scalar_select %p48, %s49, %s50
      %p54 = pneg %p48
      %p55 = scmp.eq.s32.totalorder %s16, 1
      %p56 = por %p54, %p55
      %p57 = scmp.ne.s32.totalorder %s49, %s52
      %p58 = scmp.eq.s32.totalorder %s16, 0
      %p59 = por %p57, %p58
      %p60 = scmp.ne.s32.totalorder %s49, %s52
      %p61 = scmp.eq.s32.totalorder %s21, 1
      %p62 = por %p60, %p61
      %p63 = scmp.ne.s32.totalorder %s52, %s53
      %p64 = scmp.eq.s32.totalorder %s21, 0
      %p65 = por %p63, %p64
      %p66 = scmp.ne.s32.totalorder %s52, %s53
      %p67 = scmp.eq.s32.totalorder %s22, 1
      %p68 = por %p66, %p67
      %p70 = scmp.ne.s32.totalorder %s53, %s69
      %p71 = scmp.eq.s32.totalorder %s22, 0
      %p72 = por %p70, %p71
      %s73 = sadd.s32 %s24, %s25
      %s74 = sadd.s32 %s38, %s34
      %s75 = ssub.s32 %s23, %s42
      %s76 = ssub.s32 %s73, %s74
      %s77 = sor.u32 %s75, %s76
      %p78 = scmp.eq.s32.totalorder %s77, 0
      %s80 = sadd.s32 %s79, 1
      %s81 = scalar_select %p78, %s79, %s80
      %p84 = pneg %p78
      %p85 = scmp.eq.s32.totalorder %s16, 1
      %p86 = por %p84, %p85
      %p87 = scmp.ne.s32.totalorder %s79, %s82
      %p88 = scmp.eq.s32.totalorder %s16, 0
      %p89 = por %p87, %p88
      %p90 = scmp.ne.s32.totalorder %s79, %s82
      %p91 = scmp.eq.s32.totalorder %s21, 1
      %p92 = por %p90, %p91
      %p93 = scmp.ne.s32.totalorder %s82, %s83
      %p94 = scmp.eq.s32.totalorder %s21, 0
      %p95 = por %p93, %p94
      %p96 = scmp.ne.s32.totalorder %s82, %s83
      %p97 = scmp.eq.s32.totalorder %s22, 1
      %p98 = por %p96, %p97
      %p100 = scmp.ne.s32.totalorder %s83, %s99
      %p101 = scmp.eq.s32.totalorder %s22, 0
      %p102 = por %p100, %p101
      %s103 = sadd.s32 %s23, %s24
      %s104 = sadd.s32 %s42, %s38
      %s105 = ssub.s32 %s103, %s104
      %p106 = scmp.eq.s32.totalorder %s105, 0
      %s108 = sadd.s32 %s107, 1
      %s109 = scalar_select %p106, %s107, %s108
      %p112 = pneg %p106
      %p113 = scmp.eq.s32.totalorder %s16, 1
      %p114 = por %p112, %p113
      %p115 = scmp.ne.s32.totalorder %s107, %s110
      %p116 = scmp.eq.s32.totalorder %s16, 0
      %p117 = por %p115, %p116
      %p118 = scmp.ne.s32.totalorder %s107, %s110
      %p119 = scmp.eq.s32.totalorder %s21, 1
      %p120 = por %p118, %p119
      %p121 = scmp.ne.s32.totalorder %s110, %s111
      %p122 = scmp.eq.s32.totalorder %s21, 0
      %p123 = por %p121, %p122
      %p124 = scmp.ne.s32.totalorder %s110, %s111
      %p125 = scmp.eq.s32.totalorder %s22, 1
      %p126 = por %p124, %p125
      %p128 = scmp.ne.s32.totalorder %s111, %s127
      %p129 = scmp.eq.s32.totalorder %s22, 0
      %p130 = por %p128, %p129
      %s131 = sadd.s32 %s23, %s24
      %s132 = sadd.s32 %s42, %s38
      %s133 = ssub.s32 %s131, %s132
      %p134 = scmp.eq.s32.totalorder %s133, 0
      %s136 = sadd.s32 %s135, 1
      %s137 = scalar_select %p134, %s135, %s136
      %p140 = pneg %p134
      %p141 = scmp.eq.s32.totalorder %s16, 1
      %p142 = por %p140, %p141
      %p143 = scmp.ne.s32.totalorder %s135, %s138
      %p144 = scmp.eq.s32.totalorder %s16, 0
      %p145 = por %p143, %p144
      %p146 = scmp.ne.s32.totalorder %s135, %s138
      %p147 = scmp.eq.s32.totalorder %s21, 1
      %p148 = por %p146, %p147
      %p149 = scmp.ne.s32.totalorder %s138, %s139
      %p150 = scmp.eq.s32.totalorder %s21, 0
      %p151 = por %p149, %p150
      %p152 = scmp.ne.s32.totalorder %s138, %s139
      %p153 = scmp.eq.s32.totalorder %s22, 1
      %p154 = por %p152, %p153
      %p156 = scmp.ne.s32.totalorder %s139, %s155
      %p157 = scmp.eq.s32.totalorder %s22, 0
      %p158 = por %p156, %p157
      %p159 = scmp.le.s32.totalorder 1, %s16
      %p160 = scmp.lt.s32.totalorder %s16, 3
      %p161 = pnand %p159, %p160
      %p162 = pneg %p161
      // Predicated region
      $region9: #{tpu_custom_call.1} parent=5 // pred_check
        _
      $region10: #{tpu_custom_call.1} parent=5 // pred_check_branch
        %164 = sbr.rel (%p161) target = $region12
      $region11: #{tpu_custom_call.1} parent=5 // pred_region
        %s165 = ssub.s32 %s16, 1
      $region12: #{tpu_custom_call.1} parent=5 // pred_fallthru
        _
      %p166 = scmp.lt.s32.totalorder %s16, 2
      // Predicated region
      $region13: #{tpu_custom_call.1} parent=5 // pred_check
        %p167 = pneg %p166
      $region14: #{tpu_custom_call.1} parent=5 // pred_check_branch
        %169 = sbr.rel (%p167) target = $region16
      $region15: #{tpu_custom_call.1} parent=5 // pred_region
        // Predicated region
        $region17: #{tpu_custom_call.1} parent=15 // pred_check
          %p170 = pneg %p59
        $region18: #{tpu_custom_call.1} parent=15 // pred_check_branch
          %172 = sbr.rel (%p170) target = $region20
        $region19: #{tpu_custom_call.1} parent=15 // pred_region
          %s173 = sand.u32 %s49, 1
          %s174 = scalar_lea.sflag [#allocation3], %s173
          %s175 = sand.u32 %s49, 1
          %s176 = smul.addr %s175, 8
          %s177 = scalar_lea.vmem [#allocation2], %s176
          %s178 = sadd.s32 %s24, %s25
          %180 = vsyncadd %s174, 0
          %s181 = smul.addr %s178, 2
          %s182 = smul.addr %s23, 8
          %s183 = sadd.s32 %s181, %s182
          %s184 = scalar_lea.hbm %s0, %s183
          %s185 = sshll.u32 %s184, 4
          %s186 = int_to_ptr.hbm [resolvable:$true] %s185
          %s187 = sshll.u32 %s177, 4
          %s188 = int_to_ptr.vmem [resolvable:$true] %s187
          %193 = dma.hbm_to_vmem [thread:$0]  %s186, 128, %s188, %s174, 32, 32, 2
        $region20: #{tpu_custom_call.1} parent=15 // pred_fallthru
          _
        // Predicated region
        $region21: #{tpu_custom_call.1} parent=15 // pred_check
          %p194 = pneg %p89
        $region22: #{tpu_custom_call.1} parent=15 // pred_check_branch
          %196 = sbr.rel (%p194) target = $region24
        $region23: #{tpu_custom_call.1} parent=15 // pred_region
          %s197 = sand.u32 %s79, 1
          %s198 = scalar_lea.sflag [#allocation5], %s197
          %s199 = sand.u32 %s79, 1
          %s200 = smul.addr %s199, 2
          %s201 = scalar_lea.vmem [#allocation4], %s200
          %s202 = sadd.s32 %s24, %s25
          %204 = vsyncadd %s198, 0
          %s205 = smul.addr %s202, 2
          %s206 = smul.addr %s23, 2
          %s207 = sadd.s32 %s205, %s206
          %s208 = scalar_lea.hbm %s1, %s207
          %s210 = sshll.u32 %s208, 4
          %s211 = int_to_ptr.hbm [resolvable:$true] %s210
          %s212 = sshll.u32 %s201, 4
          %s213 = int_to_ptr.vmem [resolvable:$true] %s212
          %215 = dma.hbm_to_vmem [thread:$0]  %s211, 32, %s213, %s198
        $region24: #{tpu_custom_call.1} parent=15 // pred_fallthru
          _
      $region16: #{tpu_custom_call.1} parent=5 // pred_fallthru
        _
      %p216 = scmp.le.s32.totalorder 1, %s16
      %p217 = scmp.lt.s32.totalorder %s16, 3
      %p218 = pnand %p216, %p217
      %p219 = pneg %p218
      // Predicated region
      $region25: #{tpu_custom_call.1} parent=5 // pred_check
        _
      $region26: #{tpu_custom_call.1} parent=5 // pred_check_branch
        %221 = sbr.rel (%p218) target = $region28
      $region27: #{tpu_custom_call.1} parent=5 // pred_region
        %s222 = ssub.s32 %s16, 1
        %s223 = sand.u32 %s52, 1
        %s224 = scalar_lea.sflag [#allocation3], %s223
        %s225 = sand.u32 %s52, 1
        %s226 = smul.addr %s225, 8
        %s227 = scalar_lea.vmem [#allocation2], %s226
        // Predicated region
        $region29: #{tpu_custom_call.1} parent=27 // pred_check
          %p228 = pneg %p65
        $region30: #{tpu_custom_call.1} parent=27 // pred_check_branch
          %230 = sbr.rel (%p228) target = $region32
        $region31: #{tpu_custom_call.1} parent=27 // pred_region
          %232 = dma.done %s224, 128
        $region32: #{tpu_custom_call.1} parent=27 // pred_fallthru
          _
        %s233 = sand.u32 %s82, 1
        %s234 = scalar_lea.sflag [#allocation5], %s233
        %s235 = sand.u32 %s82, 1
        %s236 = smul.addr %s235, 2
        %s237 = scalar_lea.vmem [#allocation4], %s236
        // Predicated region
        $region33: #{tpu_custom_call.1} parent=27 // pred_check
          %p238 = pneg %p95
        $region34: #{tpu_custom_call.1} parent=27 // pred_check_branch
          %240 = sbr.rel (%p238) target = $region36
        $region35: #{tpu_custom_call.1} parent=27 // pred_region
          %242 = dma.done %s234, 32
        $region36: #{tpu_custom_call.1} parent=27 // pred_fallthru
          _
        %s243 = sand.u32 %s52, 1
        %s244 = scalar_lea.sflag [#allocation3], %s243
        %s245 = sand.u32 %s52, 1
        %s246 = smul.addr %s245, 8
        %s247 = scalar_lea.vmem [#allocation2], %s246
        %p248 = pneg %p65
        %p249 = pneg %p62
        %s250 = sand.u32 %s82, 1
        %s251 = scalar_lea.sflag [#allocation5], %s250
        %s252 = sand.u32 %s82, 1
        %s253 = smul.addr %s252, 2
        %s254 = scalar_lea.vmem [#allocation4], %s253
        %p255 = pneg %p95
        %p256 = pneg %p92
        %p257 = pneg %p123
        %p258 = pneg %p120
        %s259 = sadd.s32 %s26, %s27
        %p260 = scmp.lt.s32.totalorder %s259, 1
        %s261 = scalar_select %p260, %s259, 1
        %s262 = scalar_lea.vmem %s2, %s261
        %p263 = pneg %p151
        %p264 = pneg %p148
        %s265 = sadd.s32 %s26, %s27
        %p266 = scmp.lt.s32.totalorder %s265, 1
        %s267 = scalar_select %p266, %s265, 1
        %s268 = scalar_lea.vmem %s3, %s267
        %s269 = sadd.s32 %s27, %s28
        %s270 = sadd.s32 %s27, %s28
        %s271 = sadd.s32 %s26, %s27
        %p272 = scmp.lt.s32.totalorder %s271, 1
        %s273 = scalar_select %p272, %s271, 1
        %s274 = scalar_lea.vmem %s2, %s273
        %s275 = sadd.s32 %s26, %s27
        %s276 = sadd.s32 %s26, %s27
        %p277 = scmp.lt.s32.totalorder %s276, 1
        %s278 = scalar_select %p277, %s276, 1
        %s279 = scalar_lea.vmem %s3, %s278
        %s280 = sadd.s32 %s26, %s27
        %v281 = vld [vmem:[%s237] sm:$0x3]
        %v282 = vld [vmem:[%s227] sm:$0x3]
        %vm283 = vcmp.eq.s32.totalorder %v281, 0
        %v284 = vsel %vm283, %v282, 0.0
        %s285 = scalar_lea.vmem %s227, 2 [#allocation2]
        %v286 = vld [vmem:[%s285] sm:$0x3]
        %vm287 = vcmp.eq.s32.totalorder %v281, 1
        %v288 = vsel %vm287, %v286, 0.0
        %v289 = vadd.f32 %v284, %v288
        %v290 = vadd.f32 %v282, %v286
        %s291 = scalar_lea.vmem %s227, 4 [#allocation2]
        %v292 = vld [vmem:[%s291] sm:$0x3]
        %vm293 = vcmp.eq.s32.totalorder %v281, 2
        %v294 = vsel %vm293, %v292, 0.0
        %v295 = vadd.f32 %v289, %v294
        %v296 = vadd.f32 %v290, %v292
        %s297 = scalar_lea.vmem %s227, 6 [#allocation2]
        %v298 = vld [vmem:[%s297] sm:$0x3]
        %vm299 = vcmp.eq.s32.totalorder %v281, 3
        %v300 = vsel %vm299, %v298, 0.0
        %v301 = vadd.f32 %v295, %v300
        %v302 = vadd.f32 %v296, %v298
        %p303 = scmp.eq.s32.totalorder %s28, 0
        // Predicated region
        $region37: #{tpu_custom_call.1} parent=27 // pred_check
          %p304 = pneg %p303
        $region38: #{tpu_custom_call.1} parent=27 // pred_check_branch
          %306 = sbr.rel (%p304) target = $region40
        $region39: #{tpu_custom_call.1} parent=27 // pred_region
          %vm307 = vcmask 0
          %308 = vst.msk [vmem:[%s274] sm:$0x1] %vm307, 0.0
          %309 = vst.msk [vmem:[%s279] sm:$0x1] %vm307, 0.0
        $region40: #{tpu_custom_call.1} parent=27 // pred_fallthru
          _
        %v310 = vld [vmem:[%s274] sm:$0x1]
        %v312 = vperm.slane %v301, 0
        %v313 = vperm.slane %v301, 1
        %vm316 = vcmask 1040384
        %v317 = vsel %vm316, %v312, 0.0
        %v318 = vsel %vm316, %v313, 0.0
        %v319 = vadd.f32 %v317, %v318
        %320 = vadd.xlane.f32.xlu0 %v319
        %v321 = vpop.xlane.xlu0 %320
        %v322 = vrot.slane %v321, 4
        %v323 = vadd.f32 %v321, %v322
        %v324 = vrot.slane %v323, 2
        %v325 = vadd.f32 %v323, %v324
        %v326 = vrot.slane %v325, 1
        %v327 = vadd.f32 %v325, %v326
        %s328 = vtos %v327
        %v329 = vstv %s328
        %v330 = vadd.f32 %v310, %v329
        %vm331 = vcmask 0
        %332 = vst.msk [vmem:[%s274] sm:$0x1] %vm331, %v330
        %v333 = vld [vmem:[%s279] sm:$0x1]
        %v335 = vperm.slane %v302, 0
        %v336 = vperm.slane %v302, 1
        %v339 = vsel %vm316, %v335, 0.0
        %v340 = vsel %vm316, %v336, 0.0
        %v341 = vadd.f32 %v339, %v340
        %342 = vadd.xlane.f32.xlu0 %v341
        %v343 = vpop.xlane.xlu0 %342
        %v344 = vrot.slane %v343, 4
        %v345 = vadd.f32 %v343, %v344
        %v346 = vrot.slane %v345, 2
        %v347 = vadd.f32 %v345, %v346
        %v348 = vrot.slane %v347, 1
        %v349 = vadd.f32 %v347, %v348
        %s350 = vtos %v349
        %v351 = vstv %s350
        %v352 = vadd.f32 %v333, %v351
        %353 = vst.msk [vmem:[%s279] sm:$0x1] %vm331, %v352
        %s354 = sadd.s32 %s26, %s27
        %p355 = scmp.lt.s32.totalorder %s354, 1
        %s356 = scalar_select %p355, %s354, 1
        %s357 = scalar_lea.vmem %s2, %s356
        %s358 = sadd.s32 %s26, %s27
        %p359 = scmp.lt.s32.totalorder %s358, 1
        %s360 = scalar_select %p359, %s358, 1
        %s361 = scalar_lea.vmem %s3, %s360
        // Predicated region
        $region41: #{tpu_custom_call.1} parent=27 // pred_check
          %p362 = pneg %p120
        $region42: #{tpu_custom_call.1} parent=27 // pred_check_branch
          %364 = sbr.rel (%p362) target = $region44
        $region43: #{tpu_custom_call.1} parent=27 // pred_region
          %s365 = sadd.s32 %s26, %s27
        $region44: #{tpu_custom_call.1} parent=27 // pred_fallthru
          _
        // Predicated region
        $region45: #{tpu_custom_call.1} parent=27 // pred_check
          %p366 = pneg %p148
        $region46: #{tpu_custom_call.1} parent=27 // pred_check_branch
          %368 = sbr.rel (%p366) target = $region48
        $region47: #{tpu_custom_call.1} parent=27 // pred_region
          %s369 = sadd.s32 %s26, %s27
        $region48: #{tpu_custom_call.1} parent=27 // pred_fallthru
          _
      $region28: #{tpu_custom_call.1} parent=5 // pred_fallthru
        _
      %p370 = scmp.le.s32.totalorder 2, %s16
      // Predicated region
      $region49: #{tpu_custom_call.1} parent=5 // pred_check
        %p371 = pneg %p370
      $region50: #{tpu_custom_call.1} parent=5 // pred_check_branch
        %373 = sbr.rel (%p371) target = $region52
      $region51: #{tpu_custom_call.1} parent=5 // pred_region
        %s374 = ssub.s32 %s16, 2
        // Predicated region
        $region53: #{tpu_custom_call.1} parent=51 // pred_check
          %p375 = pneg %p126
        $region54: #{tpu_custom_call.1} parent=51 // pred_check_branch
          %377 = sbr.rel (%p375) target = $region56
        $region55: #{tpu_custom_call.1} parent=51 // pred_region
          %s378 = sadd.s32 %s29, %s30
          %p379 = scmp.lt.s32.totalorder %s378, 1
          %s380 = scalar_select %p379, %s378, 1
          %s381 = scalar_lea.vmem %s2, %s380
        $region56: #{tpu_custom_call.1} parent=51 // pred_fallthru
          _
        // Predicated region
        $region57: #{tpu_custom_call.1} parent=51 // pred_check
          %p382 = pneg %p154
        $region58: #{tpu_custom_call.1} parent=51 // pred_check_branch
          %384 = sbr.rel (%p382) target = $region60
        $region59: #{tpu_custom_call.1} parent=51 // pred_region
          %s385 = sadd.s32 %s29, %s30
          %p386 = scmp.lt.s32.totalorder %s385, 1
          %s387 = scalar_select %p386, %s385, 1
          %s388 = scalar_lea.vmem %s3, %s387
        $region60: #{tpu_custom_call.1} parent=51 // pred_fallthru
          _
      $region52: #{tpu_custom_call.1} parent=5 // pred_fallthru
        _
    $region6: #{tpu_custom_call.1} parent=1 // loop_footer
      %s20 = sadd.s32 1, %s16
    $region7: #{tpu_custom_call.1} parent=1 // loop_footer_branch
      %15 = sbr.rel target = $region3
    $region8: #{tpu_custom_call.1} parent=1 // loop_exit
      _
    %389 = vsyncpa [#allocation3], 1
    %s390 = scalar_lea.sflag [#allocation3], 1
    %391 = vsyncpa %s390, 1
    %392 = vsyncpa [#allocation5], 1
    %s393 = scalar_lea.sflag [#allocation5], 1
    %394 = vsyncpa %s393, 1

</llo_original>
